<compile_context>
chip_gen: v7x
topology: tpu7x:2x2x1
jax: 0.10.0
libtpu: 0.0.40
codegen_flags: <defaults>
</compile_context>

<pallas_src>
import functools

import jax
import jax.numpy as jnp
from jax import lax
from jax.experimental import pallas as pl
from jax.experimental.pallas import tpu as pltpu


def _round_up(n, m):
    return ((n + m - 1) // m) * m


# ---------------------------------------------------------------------------
# Kernels
# ---------------------------------------------------------------------------

def _ode_step_kernel(x_ref, z_ref, w1x_ref, w1z_ref, b1_ref,
                     w2_ref, b2_ref, w3s_ref, b3s_ref, out_ref):
    """Single f(t, z, x) evaluation for one batch tile."""
    # h1 = tanh(x @ W1x + z @ W1z + b1)   -- split-W1, no lane-axis concat
    h1 = jnp.tanh(
        jnp.dot(x_ref[...], w1x_ref[...], preferred_element_type=jnp.float32)
        + jnp.dot(z_ref[...], w1z_ref[...], preferred_element_type=jnp.float32)
        + b1_ref[...]
    )
    h2 = jnp.tanh(
        jnp.dot(h1, w2_ref[...], preferred_element_type=jnp.float32)
        + b2_ref[...]
    )
    # W3s / b3s are pre-scaled by 2500 (constant fold, not a per-call op).
    out = jnp.dot(h2, w3s_ref[...], preferred_element_type=jnp.float32) + b3s_ref[...]
    out_ref[...] = out.astype(out_ref.dtype)


def _ode_euler_kernel(x_seq_ref, z0_ref, w1x_ref, w1z_ref, b1_ref,
                      w2_ref, b2_ref, w3s_ref, b3s_ref, zout_ref, *, dt):
    """Fused explicit-Euler integration of z' = f(t, z, x_t) for one batch tile.

    Weights stay VMEM-resident across all steps; z is carried in registers/VMEM.
    """
    n_steps = x_seq_ref.shape[0]

    def mlp(x, z):
        h1 = jnp.tanh(
            jnp.dot(x, w1x_ref[...], preferred_element_type=jnp.float32)
            + jnp.dot(z, w1z_ref[...], preferred_element_type=jnp.float32)
            + b1_ref[...]
        )
        h2 = jnp.tanh(
            jnp.dot(h1, w2_ref[...], preferred_element_type=jnp.float32)
            + b2_ref[...]
        )
        return jnp.dot(h2, w3s_ref[...], preferred_element_type=jnp.float32) + b3s_ref[...]

    def body(s, z):
        x_t = x_seq_ref[s]          # dynamic index along leading (step) axis
        return z + dt * mlp(x_t, z)

    zout_ref[...] = lax.fori_loop(0, n_steps, body, z0_ref[...]).astype(zout_ref.dtype)


# ---------------------------------------------------------------------------
# Wrappers
# ---------------------------------------------------------------------------

def _pick_tile_b(B, tile_b):
    # Tile must be a multiple of 8 (sublane). Small enough to fit any chip's
    # VMEM at these feature widths (even v7x's 64 MiB budget is far from binding).
    return min(tile_b, _round_up(B, 8))


def controlled_ode_forward(x, z, params, *, tile_b=256):
    """Pallas implementation of ControlledODE.forward(t, z, x).

    x: [B, dim_x] f32, z: [B, dim_z] f32.
    params: prepared dict (see prepare_params) with W1x, W1z, b1, W2, b2, W3s, b3s.
    returns [B, dim_z] f32.
    """
    B, dim_x = x.shape
    _, dim_z = z.shape
    H = params["b1"].shape[-1]

    tb = _pick_tile_b(B, tile_b)
    Bp = _round_up(B, tb)
    if Bp != B:
        x = jnp.pad(x, ((0, Bp - B), (0, 0)))
        z = jnp.pad(z, ((0, Bp - B), (0, 0)))

    batch_spec = lambda feat: pl.BlockSpec((tb, feat), lambda i: (i, 0))
    resident = lambda shape: pl.BlockSpec(shape, lambda i: (0, 0))  # DMA'd once

    out = pl.pallas_call(
        _ode_step_kernel,
        out_shape=jax.ShapeDtypeStruct((Bp, dim_z), jnp.float32),
        grid=(Bp // tb,),
        in_specs=[
            batch_spec(dim_x), batch_spec(dim_z),
            resident((dim_x, H)), resident((dim_z, H)), resident((1, H)),
            resident((H, H)), resident((1, H)),
            resident((H, dim_z)), resident((1, dim_z)),
        ],
        out_specs=pl.BlockSpec((tb, dim_z), lambda i: (i, 0)),
        compiler_params=pltpu.CompilerParams(
            dimension_semantics=("parallel",)),
    )(x, z, params["W1x"], params["W1z"], params["b1"],
      params["W2"], params["b2"], params["W3s"], params["b3s"])
    return out[:B]


def controlled_ode_integrate(x_seq, z0, dt, params, *, tile_b=256):
    """Fused Euler integration: z_{s+1} = z_s + dt * forward(t_s, z_s, x_seq[s]).

    x_seq: [n_steps, B, dim_x] f32 (control input per step), z0: [B, dim_z] f32.
    Single pallas_call; weights stay VMEM-resident across all steps.
    """
    n_steps, B, dim_x = x_seq.shape
    _, dim_z = z0.shape
    H = params["b1"].shape[-1]

    tb = _pick_tile_b(B, tile_b)
    Bp = _round_up(B, tb)
    if Bp != B:
        x_seq = jnp.pad(x_seq, ((0, 0), (0, Bp - B), (0, 0)))
        z0 = jnp.pad(z0, ((0, Bp - B), (0, 0)))

    resident = lambda shape: pl.BlockSpec(shape, lambda i: (0, 0))
    kernel = functools.partial(_ode_euler_kernel, dt=float(dt))

    z_final = pl.pallas_call(
        kernel,
        out_shape=jax.ShapeDtypeStruct((Bp, dim_z), jnp.float32),
        grid=(Bp // tb,),
        in_specs=[
            pl.BlockSpec((n_steps, tb, dim_x), lambda i: (0, i, 0)),
            pl.BlockSpec((tb, dim_z), lambda i: (i, 0)),
            resident((dim_x, H)), resident((dim_z, H)), resident((1, H)),
            resident((H, H)), resident((1, H)),
            resident((H, dim_z)), resident((1, dim_z)),
        ],
        out_specs=pl.BlockSpec((tb, dim_z), lambda i: (i, 0)),
        compiler_params=pltpu.CompilerParams(
            dimension_semantics=("parallel",)),
    )(x_seq, z0, params["W1x"], params["W1z"], params["b1"],
      params["W2"], params["b2"], params["W3s"], params["b3s"])
    return z_final[:B]


# ---------------------------------------------------------------------------
# Parameter init / prep / references
# ---------------------------------------------------------------------------

def init_params(key, dim_x, dim_z, hidden_size):
    """Synthetic init mirroring nn.Linear shapes, stored [in, out]."""
    k1, k2, k3, k4, k5, k6 = jax.random.split(key, 6)
    din = dim_x + dim_z
    s1 = 1.0 / jnp.sqrt(din)
    s2 = 1.0 / jnp.sqrt(hidden_size)
    return {
        "W1": jax.random.uniform(k1, (din, hidden_size), jnp.float32, -s1, s1),
        "b1": jax.random.uniform(k2, (1, hidden_size), jnp.float32, -s1, s1),
        "W2": jax.random.uniform(k3, (hidden_size, hidden_size), jnp.float32, -s2, s2),
        "b2": jax.random.uniform(k4, (1, hidden_size), jnp.float32, -s2, s2),
        "W3": jax.random.uniform(k5, (hidden_size, dim_z), jnp.float32, -s2, s2),
        "b3": jax.random.uniform(k6, (1, dim_z), jnp.float32, -s2, s2),
    }


def prepare_params(p, dim_x):
    """One-time transform for the kernel: split W1 and fold the *2500 scale."""
    return {
        "W1x": p["W1"][:dim_x, :],
        "W1z": p["W1"][dim_x:, :],
        "b1": p["b1"],
        "W2": p["W2"],
        "b2": p["b2"],
        "W3s": p["W3"] * 2500.0,
        "b3s": p["b3"] * 2500.0,
    }


def _reference_forward(x, z, p):
    z_aug = jnp.concatenate([x, z], axis=-1)
    h1 = jnp.tanh(z_aug @ p["W1"] + p["b1"])
    h2 = jnp.tanh(h1 @ p["W2"] + p["b2"])
    return (h2 @ p["W3"] + p["b3"]) * 2500.0


def _reference_integrate(x_seq, z0, dt, p):
    def body(z, x_t):
        return z + dt * _reference_forward(x_t, z, p), None
    z_final, _ = lax.scan(body, z0, x_seq)
    return z_final


if __name__ == "__main__":
    dim_x, dim_z, hidden = 4, 4, 32
    batch = 8
    n_steps = 16
    dt = 1e-4

    key = jax.random.PRNGKey(0)
    kp, kx, kz, kxs = jax.random.split(key, 4)

    raw_params = init_params(kp, dim_x, dim_z, hidden)
    params = prepare_params(raw_params, dim_x)

    x = jax.random.normal(kx, (batch, dim_x), jnp.float32)
    z = jax.random.normal(kz, (batch, dim_z), jnp.float32)

    # Single forward evaluation (module semantics).
    out = jax.block_until_ready(controlled_ode_forward(x, z, params))
    ref = _reference_forward(x, z, raw_params)
    assert out.shape == (batch, dim_z)
    assert jnp.allclose(out, ref, rtol=1e-4, atol=1e-2), "forward mismatch vs reference"

    # Fused solver loop (perf-review structural win): many forward() steps, one kernel.
    x_seq = jax.random.normal(kxs, (n_steps, batch, dim_x), jnp.float32) * 0.1
    z_final = jax.block_until_ready(controlled_ode_integrate(x_seq, z, dt, params))
    ref_final = _reference_integrate(x_seq, z, dt, raw_params)
    assert z_final.shape == (batch, dim_z)
    assert jnp.allclose(z_final, ref_final, rtol=1e-4, atol=1e-3), "integrate mismatch"

    print("KERNEL_OK")
</pallas_src>

<mosaic_0001>
module attributes {stable_mosaic.version = 11 : i64} {
  func.func @_ode_step_kernel(%arg0: i32, %arg1: memref<8x4xf32, #tpu.memory_space<vmem>>, %arg2: memref<8x4xf32, #tpu.memory_space<vmem>>, %arg3: memref<4x32xf32, #tpu.memory_space<vmem>>, %arg4: memref<4x32xf32, #tpu.memory_space<vmem>>, %arg5: memref<1x32xf32, #tpu.memory_space<vmem>>, %arg6: memref<32x32xf32, #tpu.memory_space<vmem>>, %arg7: memref<1x32xf32, #tpu.memory_space<vmem>>, %arg8: memref<32x4xf32, #tpu.memory_space<vmem>>, %arg9: memref<1x4xf32, #tpu.memory_space<vmem>>, %arg10: memref<8x4xf32, #tpu.memory_space<vmem>>) attributes {dimension_semantics = [#tpu.dimension_semantics<parallel>], iteration_bounds = array<i64: 1>, scalar_prefetch = 0 : i64, scratch_operands = 0 : i64, tpu.core_type = #tpu.core_type<tc>, window_params = [{transform_indices = @transform_0, window_bounds = array<i64: 8, 4>}, {transform_indices = @transform_1, window_bounds = array<i64: 8, 4>}, {pipeline_mode = #tpu.pipeline_mode<synchronous>, transform_indices = @transform_2, window_bounds = array<i64: 4, 32>}, {pipeline_mode = #tpu.pipeline_mode<synchronous>, transform_indices = @transform_3, window_bounds = array<i64: 4, 32>}, {pipeline_mode = #tpu.pipeline_mode<synchronous>, transform_indices = @transform_4, window_bounds = array<i64: 1, 32>}, {pipeline_mode = #tpu.pipeline_mode<synchronous>, transform_indices = @transform_5, window_bounds = array<i64: 32, 32>}, {pipeline_mode = #tpu.pipeline_mode<synchronous>, transform_indices = @transform_6, window_bounds = array<i64: 1, 32>}, {pipeline_mode = #tpu.pipeline_mode<synchronous>, transform_indices = @transform_7, window_bounds = array<i64: 32, 4>}, {pipeline_mode = #tpu.pipeline_mode<synchronous>, transform_indices = @transform_8, window_bounds = array<i64: 1, 4>}, {transform_indices = @transform_9, window_bounds = array<i64: 8, 4>}]} {
    %c0 = arith.constant 0 : index
    %c0_0 = arith.constant 0 : index
    %0 = vector.load %arg1[%c0, %c0_0] : memref<8x4xf32, #tpu.memory_space<vmem>>, vector<8x4xf32>
    %c0_1 = arith.constant 0 : index
    %c0_2 = arith.constant 0 : index
    %1 = vector.load %arg3[%c0_1, %c0_2] : memref<4x32xf32, #tpu.memory_space<vmem>>, vector<4x32xf32>
    %cst = arith.constant dense<0.000000e+00> : vector<8x32xf32>
    %2 = tpu.matmul %0, %1, %cst {dimension_numbers = #tpu.dot_dimension_numbers<[1], [0], [0], [1], [0, 0, 1, 1], [], []>} : vector<8x4xf32>, vector<4x32xf32>, vector<8x32xf32> -> vector<8x32xf32>
    %c0_3 = arith.constant 0 : index
    %c0_4 = arith.constant 0 : index
    %3 = vector.load %arg2[%c0_3, %c0_4] : memref<8x4xf32, #tpu.memory_space<vmem>>, vector<8x4xf32>
    %c0_5 = arith.constant 0 : index
    %c0_6 = arith.constant 0 : index
    %4 = vector.load %arg4[%c0_5, %c0_6] : memref<4x32xf32, #tpu.memory_space<vmem>>, vector<4x32xf32>
    %cst_7 = arith.constant dense<0.000000e+00> : vector<8x32xf32>
    %5 = tpu.matmul %3, %4, %cst_7 {dimension_numbers = #tpu.dot_dimension_numbers<[1], [0], [0], [1], [0, 0, 1, 1], [], []>} : vector<8x4xf32>, vector<4x32xf32>, vector<8x32xf32> -> vector<8x32xf32>
    %6 = arith.addf %2, %5 : vector<8x32xf32>
    %c0_8 = arith.constant 0 : index
    %c0_9 = arith.constant 0 : index
    %7 = vector.load %arg5[%c0_8, %c0_9] : memref<1x32xf32, #tpu.memory_space<vmem>>, vector<1x32xf32>
    %8 = vector.broadcast %7 : vector<1x32xf32> to vector<8x32xf32>
    %9 = arith.addf %6, %8 : vector<8x32xf32>
    %10 = math.tanh %9 : vector<8x32xf32>
    %c0_10 = arith.constant 0 : index
    %c0_11 = arith.constant 0 : index
    %11 = vector.load %arg6[%c0_10, %c0_11] : memref<32x32xf32, #tpu.memory_space<vmem>>, vector<32x32xf32>
    %cst_12 = arith.constant dense<0.000000e+00> : vector<8x32xf32>
    %12 = tpu.matmul %10, %11, %cst_12 {dimension_numbers = #tpu.dot_dimension_numbers<[1], [0], [0], [1], [0, 0, 1, 1], [], []>} : vector<8x32xf32>, vector<32x32xf32>, vector<8x32xf32> -> vector<8x32xf32>
    %c0_13 = arith.constant 0 : index
    %c0_14 = arith.constant 0 : index
    %13 = vector.load %arg7[%c0_13, %c0_14] : memref<1x32xf32, #tpu.memory_space<vmem>>, vector<1x32xf32>
    %14 = vector.broadcast %13 : vector<1x32xf32> to vector<8x32xf32>
    %15 = arith.addf %12, %14 : vector<8x32xf32>
    %16 = math.tanh %15 : vector<8x32xf32>
    %c0_15 = arith.constant 0 : index
    %c0_16 = arith.constant 0 : index
    %17 = vector.load %arg8[%c0_15, %c0_16] : memref<32x4xf32, #tpu.memory_space<vmem>>, vector<32x4xf32>
    %cst_17 = arith.constant dense<0.000000e+00> : vector<8x4xf32>
    %18 = tpu.matmul %16, %17, %cst_17 {dimension_numbers = #tpu.dot_dimension_numbers<[1], [0], [0], [1], [0, 0, 1, 1], [], []>} : vector<8x32xf32>, vector<32x4xf32>, vector<8x4xf32> -> vector<8x4xf32>
    %c0_18 = arith.constant 0 : index
    %c0_19 = arith.constant 0 : index
    %19 = vector.load %arg9[%c0_18, %c0_19] : memref<1x4xf32, #tpu.memory_space<vmem>>, vector<1x4xf32>
    %20 = vector.broadcast %19 : vector<1x4xf32> to vector<8x4xf32>
    %21 = arith.addf %18, %20 : vector<8x4xf32>
    %c0_20 = arith.constant 0 : index
    %c0_21 = arith.constant 0 : index
    %22 = vector.load %arg10[%c0_20, %c0_21] : memref<8x4xf32, #tpu.memory_space<vmem>>, vector<8x4xf32>
    tpu.vector_store %arg10[%c0_20, %c0_21], %21 {strides = array<i32>} : memref<8x4xf32, #tpu.memory_space<vmem>>, vector<8x4xf32>,
    return
  }
  func.func @transform_0(%arg0: i32) -> (i32, i32) {
    %c0_i32 = arith.constant 0 : i32
    %c0_i32_0 = arith.constant 0 : i32
    return %arg0, %c0_i32 : i32, i32
  }
  func.func @transform_1(%arg0: i32) -> (i32, i32) {
    %c0_i32 = arith.constant 0 : i32
    %c0_i32_0 = arith.constant 0 : i32
    return %arg0, %c0_i32 : i32, i32
  }
  func.func @transform_2(%arg0: i32) -> (i32, i32) {
    %c0_i32 = arith.constant 0 : i32
    %c0_i32_0 = arith.constant 0 : i32
    %c0_i32_1 = arith.constant 0 : i32
    return %c0_i32, %c0_i32_0 : i32, i32
  }
  func.func @transform_3(%arg0: i32) -> (i32, i32) {
    %c0_i32 = arith.constant 0 : i32
    %c0_i32_0 = arith.constant 0 : i32
    %c0_i32_1 = arith.constant 0 : i32
    return %c0_i32, %c0_i32_0 : i32, i32
  }
  func.func @transform_4(%arg0: i32) -> (i32, i32) {
    %c0_i32 = arith.constant 0 : i32
    %c0_i32_0 = arith.constant 0 : i32
    %c0_i32_1 = arith.constant 0 : i32
    return %c0_i32, %c0_i32_0 : i32, i32
  }
  func.func @transform_5(%arg0: i32) -> (i32, i32) {
    %c0_i32 = arith.constant 0 : i32
    %c0_i32_0 = arith.constant 0 : i32
    %c0_i32_1 = arith.constant 0 : i32
    return %c0_i32, %c0_i32_0 : i32, i32
  }
  func.func @transform_6(%arg0: i32) -> (i32, i32) {
    %c0_i32 = arith.constant 0 : i32
    %c0_i32_0 = arith.constant 0 : i32
    %c0_i32_1 = arith.constant 0 : i32
    return %c0_i32, %c0_i32_0 : i32, i32
  }
  func.func @transform_7(%arg0: i32) -> (i32, i32) {
    %c0_i32 = arith.constant 0 : i32
    %c0_i32_0 = arith.constant 0 : i32
    %c0_i32_1 = arith.constant 0 : i32
    return %c0_i32, %c0_i32_0 : i32, i32
  }
  func.func @transform_8(%arg0: i32) -> (i32, i32) {
    %c0_i32 = arith.constant 0 : i32
    %c0_i32_0 = arith.constant 0 : i32
    %c0_i32_1 = arith.constant 0 : i32
    return %c0_i32, %c0_i32_0 : i32, i32
  }
  func.func @transform_9(%arg0: i32) -> (i32, i32) {
    %c0_i32 = arith.constant 0 : i32
    %c0_i32_0 = arith.constant 0 : i32
    return %arg0, %c0_i32 : i32, i32
  }
}

</mosaic_0001>

<llo_original>
// kernel: tpu_custom_call.1
$region0: #{tpu_custom_call.1}
  #allocation0 [shape = 'u32[]', space=smem, size = 0x4, offset = 0x4, fixed_abs, tag = 'smem constant byte address 0x4 - core index']
  #allocation1 [shape = 'u32[144,128]{1,0:T(1,128)}', space=vmem, size = 0x12000, scoped, tag = 'internal scratch']
  %s0 = inlined_call_operand.vmem [shape: f32[8,4], index: 0, kind: input, shape index: {}]
  %s1 = inlined_call_operand.vmem [shape: f32[8,4], index: 1, kind: input, shape index: {}]
  %s2 = inlined_call_operand.vmem [shape: f32[4,32], index: 2, kind: input, shape index: {}]
  %s3 = inlined_call_operand.vmem [shape: f32[4,32], index: 3, kind: input, shape index: {}]
  %s4 = inlined_call_operand.vmem [shape: f32[1,32], index: 4, kind: input, shape index: {}]
  %s5 = inlined_call_operand.vmem [shape: f32[32,32], index: 5, kind: input, shape index: {}]
  %s6 = inlined_call_operand.vmem [shape: f32[1,32], index: 6, kind: input, shape index: {}]
  %s7 = inlined_call_operand.vmem [shape: f32[32,4], index: 7, kind: input, shape index: {}]
  %s8 = inlined_call_operand.vmem [shape: f32[1,4], index: 8, kind: input, shape index: {}]
  %s9 = inlined_call_operand.vmem [shape: f32[8,4], index: 9, kind: output, shape index: {}]
  %s10 = sld [smem:[#allocation0]]
  $region46: #{tpu_custom_call.1} parent=0
    _
  %s12 = ssub.s32 1, %s10
  %s13 = scalar_select 0, %s12, %s10
  // Predicated region
  $region2: #{tpu_custom_call.1} parent=0 // pred_check
    _
  $region3: #{tpu_custom_call.1} parent=0 // pred_check_branch
    %15 = sbr.rel (0) target = $region5
  $region4: #{tpu_custom_call.1} parent=0 // pred_region
    _
  $region5: #{tpu_custom_call.1} parent=0 // pred_fallthru
    _
  // Predicated region
  $region6: #{tpu_custom_call.1} parent=0 // pred_check
    _
  $region7: #{tpu_custom_call.1} parent=0 // pred_check_branch
    %17 = sbr.rel (0) target = $region9
  $region8: #{tpu_custom_call.1} parent=0 // pred_region
    _
  $region9: #{tpu_custom_call.1} parent=0 // pred_fallthru
    _
  // Predicated region
  $region10: #{tpu_custom_call.1} parent=0 // pred_check
    _
  $region11: #{tpu_custom_call.1} parent=0 // pred_check_branch
    %19 = sbr.rel (0) target = $region13
  $region12: #{tpu_custom_call.1} parent=0 // pred_region
    _
  $region13: #{tpu_custom_call.1} parent=0 // pred_fallthru
    _
  // Predicated region
  $region14: #{tpu_custom_call.1} parent=0 // pred_check
    _
  $region15: #{tpu_custom_call.1} parent=0 // pred_check_branch
    %21 = sbr.rel (0) target = $region17
  $region16: #{tpu_custom_call.1} parent=0 // pred_region
    _
  $region17: #{tpu_custom_call.1} parent=0 // pred_fallthru
    _
  // Predicated region
  $region18: #{tpu_custom_call.1} parent=0 // pred_check
    _
  $region19: #{tpu_custom_call.1} parent=0 // pred_check_branch
    %23 = sbr.rel (0) target = $region21
  $region20: #{tpu_custom_call.1} parent=0 // pred_region
    _
  $region21: #{tpu_custom_call.1} parent=0 // pred_fallthru
    _
  // Predicated region
  $region22: #{tpu_custom_call.1} parent=0 // pred_check
    _
  $region23: #{tpu_custom_call.1} parent=0 // pred_check_branch
    %25 = sbr.rel (0) target = $region25
  $region24: #{tpu_custom_call.1} parent=0 // pred_region
    _
  $region25: #{tpu_custom_call.1} parent=0 // pred_fallthru
    _
  // Predicated region
  $region26: #{tpu_custom_call.1} parent=0 // pred_check
    _
  $region27: #{tpu_custom_call.1} parent=0 // pred_check_branch
    %27 = sbr.rel (0) target = $region29
  $region28: #{tpu_custom_call.1} parent=0 // pred_region
    _
  $region29: #{tpu_custom_call.1} parent=0 // pred_fallthru
    _
  // Predicated region
  $region30: #{tpu_custom_call.1} parent=0 // pred_check
    _
  $region31: #{tpu_custom_call.1} parent=0 // pred_check_branch
    %29 = sbr.rel (0) target = $region33
  $region32: #{tpu_custom_call.1} parent=0 // pred_region
    _
  $region33: #{tpu_custom_call.1} parent=0 // pred_fallthru
    _
  // Predicated region
  $region34: #{tpu_custom_call.1} parent=0 // pred_check
    _
  $region35: #{tpu_custom_call.1} parent=0 // pred_check_branch
    %31 = sbr.rel (0) target = $region37
  $region36: #{tpu_custom_call.1} parent=0 // pred_region
    _
  $region37: #{tpu_custom_call.1} parent=0 // pred_fallthru
    _
  %v32 = vld [vmem:[%s0] sm:$0xff]
  %v33 = vld [vmem:[%s2] sm:$0xf]
  %v34 = vld [vmem:[%s1] sm:$0xff]
  %v35 = vld [vmem:[%s3] sm:$0xf]
  %vm36 = vcmask 31744
  %v38 = vsel %vm36, %v34, 0
  %vm40 = vcmask 1043456
  %v42 = vsel %vm40, %v35, 0
  %44 = vmatprep.subr.mxu0 0.0
  %45 = vmatpush1.msra.mxu0 %v42
  %46 = vmatprep.subr.mxu0 0.0
  %47 = vmatpush1.msra.mxu0 0.0
  %48 = vmatprep.subr.mxu0 0.0
  %49 = vmatpush1.msra.mxu0 0.0
  %50 = vmatprep.subr.mxu0 0.0
  %51 = vmatpush1.msra.mxu0 0.0
  %52 = vmatprep.subr.mxu0 0.0
  %53 = vmatpush1.msra.mxu0 0.0
  %54 = vmatprep.subr.mxu0 0.0
  %55 = vmatpush1.msra.mxu0 0.0
  %56 = vmatprep.subr.mxu0 0.0
  %57 = vmatpush1.msra.mxu0 0.0
  %58 = vmatprep.subr.mxu0 0.0
  %59 = vmatpush1.msra.mxu0 0.0
  %60 = vmatprep.subr.mxu0 0.0
  %61 = vmatpush1.msra.mxu0 0.0
  %62 = vmatprep.subr.mxu0 0.0
  %63 = vmatpush1.msra.mxu0 0.0
  %64 = vmatprep.subr.mxu0 0.0
  %65 = vmatpush1.msra.mxu0 0.0
  %66 = vmatprep.subr.mxu0 0.0
  %67 = vmatpush1.msra.mxu0 0.0
  %68 = vmatprep.subr.mxu0 0.0
  %69 = vmatpush1.msra.mxu0 0.0
  %70 = vmatprep.subr.mxu0 0.0
  %71 = vmatpush1.msra.mxu0 0.0
  %72 = vmatprep.subr.mxu0 0.0
  %73 = vmatpush1.msra.mxu0 0.0
  %74 = vmatprep.subr.mxu0 0.0
  %75 = vmatpush1.msra.mxu0 0.0
  %76 = vmatprep.subr.mxu0 0.0
  %77 = vmatpush1.msra.mxu0 0.0
  %78 = vmatprep.subr.mxu0 0.0
  %79 = vmatpush1.msra.mxu0 0.0
  %80 = vmatprep.subr.mxu0 0.0
  %81 = vmatpush1.msra.mxu0 0.0
  %82 = vmatprep.subr.mxu0 0.0
  %83 = vmatpush1.msra.mxu0 0.0
  %84 = vmatprep.subr.mxu0 0.0
  %85 = vmatpush1.msra.mxu0 0.0
  %86 = vmatprep.subr.mxu0 0.0
  %87 = vmatpush1.msra.mxu0 0.0
  %88 = vmatprep.subr.mxu0 0.0
  %89 = vmatpush1.msra.mxu0 0.0
  %90 = vmatprep.subr.mxu0 0.0
  %91 = vmatpush1.msra.mxu0 0.0
  %92 = vmatprep.subr.mxu0 0.0
  %93 = vmatpush1.msra.mxu0 0.0
  %94 = vmatprep.subr.mxu0 0.0
  %95 = vmatpush1.msra.mxu0 0.0
  %96 = vmatprep.subr.mxu0 0.0
  %97 = vmatpush1.msra.mxu0 0.0
  %98 = vmatprep.subr.mxu0 0.0
  %99 = vmatpush1.msra.mxu0 0.0
  %100 = vmatprep.subr.mxu0 0.0
  %101 = vmatpush1.msra.mxu0 0.0
  %102 = vmatprep.subr.mxu0 0.0
  %103 = vmatpush1.msra.mxu0 0.0
  %104 = vmatprep.subr.mxu0 0.0
  %105 = vmatpush1.msra.mxu0 0.0
  %106 = vmatprep.subr.mxu0 0.0
  %107 = vmatpush1.msra.mxu0 0.0
  %108 = vmatprep.mubr.f32.mxu0 0.0
  %109 = vmatmul.mubr.f32.gmra.mrb[0].mxu0 %v38
  %v110 = vpop.f32.mrb[0].mxu0
  %v111 = vadd.f32 0.0, %v110
  %v112 = vpop.f32.mrb[0].mxu0
  %113 = vdwg.mxu0
  %v115 = vsel %vm36, %v32, 0
  %v118 = vsel %vm40, %v33, 0
  %120 = vmatprep.subr.mxu0 0.0
  %121 = vmatpush1.msra.mxu0 %v118
  %122 = vmatprep.subr.mxu0 0.0
  %123 = vmatpush1.msra.mxu0 0.0
  %124 = vmatprep.subr.mxu0 0.0
  %125 = vmatpush1.msra.mxu0 0.0
  %126 = vmatprep.subr.mxu0 0.0
  %127 = vmatpush1.msra.mxu0 0.0
  %128 = vmatprep.subr.mxu0 0.0
  %129 = vmatpush1.msra.mxu0 0.0
  %130 = vmatprep.subr.mxu0 0.0
  %131 = vmatpush1.msra.mxu0 0.0
  %132 = vmatprep.subr.mxu0 0.0
  %133 = vmatpush1.msra.mxu0 0.0
  %134 = vmatprep.subr.mxu0 0.0
  %135 = vmatpush1.msra.mxu0 0.0
  %136 = vmatprep.subr.mxu0 0.0
  %137 = vmatpush1.msra.mxu0 0.0
  %138 = vmatprep.subr.mxu0 0.0
  %139 = vmatpush1.msra.mxu0 0.0
  %140 = vmatprep.subr.mxu0 0.0
  %141 = vmatpush1.msra.mxu0 0.0
  %142 = vmatprep.subr.mxu0 0.0
  %143 = vmatpush1.msra.mxu0 0.0
  %144 = vmatprep.subr.mxu0 0.0
  %145 = vmatpush1.msra.mxu0 0.0
  %146 = vmatprep.subr.mxu0 0.0
  %147 = vmatpush1.msra.mxu0 0.0
  %148 = vmatprep.subr.mxu0 0.0
  %149 = vmatpush1.msra.mxu0 0.0
  %150 = vmatprep.subr.mxu0 0.0
  %151 = vmatpush1.msra.mxu0 0.0
  %152 = vmatprep.subr.mxu0 0.0
  %153 = vmatpush1.msra.mxu0 0.0
  %154 = vmatprep.subr.mxu0 0.0
  %155 = vmatpush1.msra.mxu0 0.0
  %156 = vmatprep.subr.mxu0 0.0
  %157 = vmatpush1.msra.mxu0 0.0
  %158 = vmatprep.subr.mxu0 0.0
  %159 = vmatpush1.msra.mxu0 0.0
  %160 = vmatprep.subr.mxu0 0.0
  %161 = vmatpush1.msra.mxu0 0.0
  %162 = vmatprep.subr.mxu0 0.0
  %163 = vmatpush1.msra.mxu0 0.0
  %164 = vmatprep.subr.mxu0 0.0
  %165 = vmatpush1.msra.mxu0 0.0
  %166 = vmatprep.subr.mxu0 0.0
  %167 = vmatpush1.msra.mxu0 0.0
  %168 = vmatprep.subr.mxu0 0.0
  %169 = vmatpush1.msra.mxu0 0.0
  %170 = vmatprep.subr.mxu0 0.0
  %171 = vmatpush1.msra.mxu0 0.0
  %172 = vmatprep.subr.mxu0 0.0
  %173 = vmatpush1.msra.mxu0 0.0
  %174 = vmatprep.subr.mxu0 0.0
  %175 = vmatpush1.msra.mxu0 0.0
  %176 = vmatprep.subr.mxu0 0.0
  %177 = vmatpush1.msra.mxu0 0.0
  %178 = vmatprep.subr.mxu0 0.0
  %179 = vmatpush1.msra.mxu0 0.0
  %180 = vmatprep.subr.mxu0 0.0
  %181 = vmatpush1.msra.mxu0 0.0
  %182 = vmatprep.subr.mxu0 0.0
  %183 = vmatpush1.msra.mxu0 0.0
  %184 = vmatprep.mubr.f32.mxu0 0.0
  %185 = vmatmul.mubr.f32.gmra.mrb[0].mxu0 %v115
  %v186 = vpop.f32.mrb[0].mxu0
  %v187 = vadd.f32 %v111, %v186
  %v188 = vpop.f32.mrb[0].mxu0
  %189 = vdwg.mxu0
  %v190 = vld [vmem:[%s4] sm:$0x1]
  %v192 = vlaneseq
  %v193 = vshrl.u32 %v192, 7
  %v194 = vsub.s32 0, %v193
  %v195 = vrot.slane %v190, %v194
  %v197 = vadd.f32 %v187, %v195
  %v198 = vtanh.pop %v197
  %v199 = vld [vmem:[%s5] sm:$0xff]
  %v200 = vld [vmem:[%s5 + $0x8] sm:$0xff]
  %v201 = vld [vmem:[%s5 + $0x10] sm:$0xff]
  %v202 = vld [vmem:[%s5 + $0x18] sm:$0xff]
  %v203 = vld [vmem:[%s6] sm:$0x1]
  %v205 = vlaneseq
  %v206 = vshrl.u32 %v205, 7
  %v207 = vsub.s32 0, %v206
  %v208 = vrot.slane %v203, %v207
  %vm210 = vcmask 261120
  %v212 = vsel %vm210, %v198, 0
  %214 = vmatprep.subr.mxu0 0.0
  %215 = vmatpush1.msra.mxu0 %v199
  %216 = vmatprep.subr.mxu0 0.0
  %217 = vmatpush1.msra.mxu0 %v200
  %218 = vmatprep.subr.mxu0 0.0
  %219 = vmatpush1.msra.mxu0 %v201
  %220 = vmatprep.subr.mxu0 0.0
  %221 = vmatpush1.msra.mxu0 %v202
  %222 = vmatprep.subr.mxu0 0.0
  %223 = vmatpush1.msra.mxu0 0.0
  %224 = vmatprep.subr.mxu0 0.0
  %225 = vmatpush1.msra.mxu0 0.0
  %226 = vmatprep.subr.mxu0 0.0
  %227 = vmatpush1.msra.mxu0 0.0
  %228 = vmatprep.subr.mxu0 0.0
  %229 = vmatpush1.msra.mxu0 0.0
  %230 = vmatprep.subr.mxu0 0.0
  %231 = vmatpush1.msra.mxu0 0.0
  %232 = vmatprep.subr.mxu0 0.0
  %233 = vmatpush1.msra.mxu0 0.0
  %234 = vmatprep.subr.mxu0 0.0
  %235 = vmatpush1.msra.mxu0 0.0
  %236 = vmatprep.subr.mxu0 0.0
  %237 = vmatpush1.msra.mxu0 0.0
  %238 = vmatprep.subr.mxu0 0.0
  %239 = vmatpush1.msra.mxu0 0.0
  %240 = vmatprep.subr.mxu0 0.0
  %241 = vmatpush1.msra.mxu0 0.0
  %242 = vmatprep.subr.mxu0 0.0
  %243 = vmatpush1.msra.mxu0 0.0
  %244 = vmatprep.subr.mxu0 0.0
  %245 = vmatpush1.msra.mxu0 0.0
  %246 = vmatprep.subr.mxu0 0.0
  %247 = vmatpush1.msra.mxu0 0.0
  %248 = vmatprep.subr.mxu0 0.0
  %249 = vmatpush1.msra.mxu0 0.0
  %250 = vmatprep.subr.mxu0 0.0
  %251 = vmatpush1.msra.mxu0 0.0
  %252 = vmatprep.subr.mxu0 0.0
  %253 = vmatpush1.msra.mxu0 0.0
  %254 = vmatprep.subr.mxu0 0.0
  %255 = vmatpush1.msra.mxu0 0.0
  %256 = vmatprep.subr.mxu0 0.0
  %257 = vmatpush1.msra.mxu0 0.0
  %258 = vmatprep.subr.mxu0 0.0
  %259 = vmatpush1.msra.mxu0 0.0
  %260 = vmatprep.subr.mxu0 0.0
  %261 = vmatpush1.msra.mxu0 0.0
  %262 = vmatprep.subr.mxu0 0.0
  %263 = vmatpush1.msra.mxu0 0.0
  %264 = vmatprep.subr.mxu0 0.0
  %265 = vmatpush1.msra.mxu0 0.0
  %266 = vmatprep.subr.mxu0 0.0
  %267 = vmatpush1.msra.mxu0 0.0
  %268 = vmatprep.subr.mxu0 0.0
  %269 = vmatpush1.msra.mxu0 0.0
  %270 = vmatprep.subr.mxu0 0.0
  %271 = vmatpush1.msra.mxu0 0.0
  %272 = vmatprep.subr.mxu0 0.0
  %273 = vmatpush1.msra.mxu0 0.0
  %274 = vmatprep.subr.mxu0 0.0
  %275 = vmatpush1.msra.mxu0 0.0
  %276 = vmatprep.subr.mxu0 0.0
  %277 = vmatpush1.msra.mxu0 0.0
  %278 = vmatprep.mubr.f32.mxu0 0.0
  %279 = vmatmul.mubr.f32.gmra.mrb[0].mxu0 %v212
  %v280 = vpop.f32.mrb[0].mxu0
  %v281 = vadd.f32 %v208, %v280
  %v282 = vpop.f32.mrb[0].mxu0
  %283 = vdwg.mxu0
  %v284 = vtanh.pop %v281
  %v285 = vld [vmem:[%s7] sm:$0xff]
  %v286 = vld [vmem:[%s7 + $0x8] sm:$0xff]
  %v287 = vld [vmem:[%s7 + $0x10] sm:$0xff]
  %v288 = vld [vmem:[%s7 + $0x18] sm:$0xff]
  %v289 = vld [vmem:[%s8] sm:$0x1]
  %v291 = vlaneseq
  %v292 = vshrl.u32 %v291, 7
  %v293 = vsub.s32 0, %v292
  %v294 = vrot.slane %v289, %v293
  %v297 = vsel %vm210, %v284, 0
  %299 = vmatprep.subr.mxu0 0.0
  %300 = vmatpush1.msra.mxu0 %v285
  %301 = vmatprep.subr.mxu0 0.0
  %302 = vmatpush1.msra.mxu0 %v286
  %303 = vmatprep.subr.mxu0 0.0
  %304 = vmatpush1.msra.mxu0 %v287
  %305 = vmatprep.subr.mxu0 0.0
  %306 = vmatpush1.msra.mxu0 %v288
  %307 = vmatprep.subr.mxu0 0.0
  %308 = vmatpush1.msra.mxu0 0.0
  %309 = vmatprep.subr.mxu0 0.0
  %310 = vmatpush1.msra.mxu0 0.0
  %311 = vmatprep.subr.mxu0 0.0
  %312 = vmatpush1.msra.mxu0 0.0
  %313 = vmatprep.subr.mxu0 0.0
  %314 = vmatpush1.msra.mxu0 0.0
  %315 = vmatprep.subr.mxu0 0.0
  %316 = vmatpush1.msra.mxu0 0.0
  %317 = vmatprep.subr.mxu0 0.0
  %318 = vmatpush1.msra.mxu0 0.0
  %319 = vmatprep.subr.mxu0 0.0
  %320 = vmatpush1.msra.mxu0 0.0
  %321 = vmatprep.subr.mxu0 0.0
  %322 = vmatpush1.msra.mxu0 0.0
  %323 = vmatprep.subr.mxu0 0.0
  %324 = vmatpush1.msra.mxu0 0.0
  %325 = vmatprep.subr.mxu0 0.0
  %326 = vmatpush1.msra.mxu0 0.0
  %327 = vmatprep.subr.mxu0 0.0
  %328 = vmatpush1.msra.mxu0 0.0
  %329 = vmatprep.subr.mxu0 0.0
  %330 = vmatpush1.msra.mxu0 0.0
  %331 = vmatprep.subr.mxu0 0.0
  %332 = vmatpush1.msra.mxu0 0.0
  %333 = vmatprep.subr.mxu0 0.0
  %334 = vmatpush1.msra.mxu0 0.0
  %335 = vmatprep.subr.mxu0 0.0
  %336 = vmatpush1.msra.mxu0 0.0
  %337 = vmatprep.subr.mxu0 0.0
  %338 = vmatpush1.msra.mxu0 0.0
  %339 = vmatprep.subr.mxu0 0.0
  %340 = vmatpush1.msra.mxu0 0.0
  %341 = vmatprep.subr.mxu0 0.0
  %342 = vmatpush1.msra.mxu0 0.0
  %343 = vmatprep.subr.mxu0 0.0
  %344 = vmatpush1.msra.mxu0 0.0
  %345 = vmatprep.subr.mxu0 0.0
  %346 = vmatpush1.msra.mxu0 0.0
  %347 = vmatprep.subr.mxu0 0.0
  %348 = vmatpush1.msra.mxu0 0.0
  %349 = vmatprep.subr.mxu0 0.0
  %350 = vmatpush1.msra.mxu0 0.0
  %351 = vmatprep.subr.mxu0 0.0
  %352 = vmatpush1.msra.mxu0 0.0
  %353 = vmatprep.subr.mxu0 0.0
  %354 = vmatpush1.msra.mxu0 0.0
  %355 = vmatprep.subr.mxu0 0.0
  %356 = vmatpush1.msra.mxu0 0.0
  %357 = vmatprep.subr.mxu0 0.0
  %358 = vmatpush1.msra.mxu0 0.0
  %359 = vmatprep.subr.mxu0 0.0
  %360 = vmatpush1.msra.mxu0 0.0
  %361 = vmatprep.subr.mxu0 0.0
  %362 = vmatpush1.msra.mxu0 0.0
  %363 = vmatprep.mubr.f32.mxu0 0.0
  %364 = vmatmul.mubr.f32.gmra.mrb[0].mxu0 %v297
  %v365 = vpop.f32.mrb[0].mxu0
  %v366 = vadd.f32 %v294, %v365
  %v367 = vpop.f32.mrb[0].mxu0
  %368 = vdwg.mxu0
  %369 = vst.msk [vmem:[%s9] sm:$0xff] %vm36, %v366
  // Predicated region
  $region38: #{tpu_custom_call.1} parent=0 // pred_check
    _
  $region39: #{tpu_custom_call.1} parent=0 // pred_check_branch
    %371 = sbr.rel (0) target = $region41
  $region40: #{tpu_custom_call.1} parent=0 // pred_region
    _
  $region41: #{tpu_custom_call.1} parent=0 // pred_fallthru
    _
  // Predicated region
  $region42: #{tpu_custom_call.1} parent=0 // pred_check
    _
  $region43: #{tpu_custom_call.1} parent=0 // pred_check_branch
    %373 = sbr.rel (0) target = $region45
  $region44: #{tpu_custom_call.1} parent=0 // pred_region
    _
  $region45: #{tpu_custom_call.1} parent=0 // pred_fallthru
    _

</llo_original>
